<compile_context>
chip_gen: v7x
topology: tpu7x:2x2x1
jax: 0.10.0
libtpu: 0.0.40
codegen_flags: <defaults>
</compile_context>

<pallas_src>
import functools
import math

import jax
import jax.numpy as jnp
from jax.experimental import pallas as pl
from jax.experimental.pallas import tpu as pltpu

_LANE = 128      # vreg lane width (last dim)
_SUBLANE = 8     # f32 sublane count (second-minor dim)
_BLOCK_M = 256   # batch tile when we do grid over rows (v6e/v7x friendly)


def _round_up(n, m):
    return ((n + m - 1) // m) * m


def _fused_mlp_kernel(*refs, relu_flags):
    """Fused MLP body.

    refs = (x_ref, w0_ref, b0_ref, w1_ref, b1_ref, ..., o_ref)
      x : (M, K0_pad)  f32
      Wi: (Ki_pad, Ni_pad) bf16   (zero-padded rows/cols)
      bi: (1, Ni_pad)  f32        (zero-padded entries)
      o : (M, Nlast_pad) f32      (lane-dense store)

    h = x; for each layer: h = relu?( (h.bf16 @ W_i) + b_i )  with f32 acc.
    Intermediates stay as values; a single lane-dense store writes the result.
    """
    x_ref = refs[0]
    o_ref = refs[-1]

    h = x_ref[...].astype(jnp.float32)                      # (M, K0_pad) f32
    for i, apply_relu in enumerate(relu_flags):
        w = refs[1 + 2 * i][...]                            # (K_pad, N_pad) bf16
        b = refs[2 + 2 * i][...]                            # (1, N_pad)    f32
        h = jnp.dot(h.astype(jnp.bfloat16), w,
                    preferred_element_type=jnp.float32) + b  # MXU, f32 acc
        if apply_relu:
            h = jnp.maximum(h, 0.0)                          # f32 VPU
    o_ref[...] = h.astype(o_ref.dtype)


@functools.partial(jax.jit,
                   static_argnames=("relu_flags", "num_classes", "block_m"))
def _forward_impl(x, weights, biases, *, relu_flags, num_classes, block_m):
    """Pad -> single fused pallas_call -> slice, all under one jit."""
    m, k = x.shape
    k0_pad = weights[0].shape[0]
    n_pad = weights[-1].shape[1]

    if block_m is None:
        m_pad = _round_up(m, _SUBLANE)
    else:
        m_pad = _round_up(m, block_m)

    # Zero-pad the input to the lane-dense padded feature width (zero columns
    # hit zero W rows, so results are identical to the unpadded math).
    x_pad = jnp.zeros((m_pad, k0_pad), jnp.float32).at[:m, :k].set(
        x.astype(jnp.float32))

    operands = [x_pad]
    for w, b in zip(weights, biases):
        operands.append(w)
        operands.append(b)

    kernel = functools.partial(_fused_mlp_kernel, relu_flags=relu_flags)
    out_shape = jax.ShapeDtypeStruct((m_pad, n_pad), jnp.float32)

    # Explicit scoped-VMEM budget: everything-resident sizes + headroom,
    # 16 MiB floor (v5e scoped default), capped well under v7x's 64 MiB.
    total_bytes = sum(int(o.size) * o.dtype.itemsize for o in operands)
    total_bytes += m_pad * n_pad * 4
    vmem_limit = int(min(48 << 20, max(16 << 20, 4 * total_bytes + (2 << 20))))

    if block_m is None:
        # Tiny batch: gridless single invocation (a size-1 grid only adds
        # pipeline bookkeeping and double-buffer allocations).
        vmem = pl.BlockSpec(memory_space=pltpu.MemorySpace.VMEM)
        out_pad = pl.pallas_call(
            kernel,
            out_shape=out_shape,
            in_specs=[vmem] * len(operands),
            out_specs=vmem,
            compiler_params=pltpu.CompilerParams(vmem_limit_bytes=vmem_limit),
        )(*operands)
    else:
        # Large batch: parallel batch-tile grid (shards across TCs on v7x).
        # Weights/biases use a constant index_map so they stay resident.
        in_specs = [pl.BlockSpec((block_m, k0_pad), lambda i: (i, 0))]
        for w, b in zip(weights, biases):
            in_specs.append(pl.BlockSpec(w.shape, lambda i: (0, 0)))
            in_specs.append(pl.BlockSpec(b.shape, lambda i: (0, 0)))
        out_pad = pl.pallas_call(
            kernel,
            out_shape=out_shape,
            grid=(m_pad // block_m,),
            in_specs=in_specs,
            out_specs=pl.BlockSpec((block_m, n_pad), lambda i: (i, 0)),
            compiler_params=pltpu.CompilerParams(
                dimension_semantics=("parallel",),
                vmem_limit_bytes=vmem_limit,
            ),
        )(*operands)

    # Padded class columns are exactly zero; slice them off outside the kernel.
    return out_pad[:m, :num_classes]


def flexible_classifier_forward(x, params):
    """Forward pass of FlexibleClassifier (inference mode) as one fused kernel."""
    m = x.shape[0]
    block_m = None if m <= _BLOCK_M else _BLOCK_M
    return _forward_impl(
        x,
        params["weights"],
        params["biases"],
        relu_flags=params["relu_flags"],
        num_classes=params["num_classes"],
        block_m=block_m,
    )


def init_flexible_classifier(key, input_size, num_classes, hidden_layers=None):
    """Init mirroring the PyTorch module's layer shapes, pre-padded for TPU.

    Each Linear(in, out) is stored as:
      W: (round_up(in,128), round_up(out,128)) bf16, zero-padded rows/cols
      b: (1, round_up(out,128))                f32,  zero-padded entries
    so padded lanes stay exactly 0 through bias-add/ReLU and the final padded
    class columns are exactly 0 (sliced off in the wrapper).
    """
    dims = []
    cur = input_size
    if hidden_layers is not None:
        for h in hidden_layers:
            dims.append((cur, h, True))   # Linear -> (Dropout) -> ReLU
            cur = h
    dims.append((cur, num_classes, False))

    weights, biases, relu_flags = [], [], []
    for fan_in, fan_out, relu in dims:
        key, kw, kb = jax.random.split(key, 3)
        bound = 1.0 / math.sqrt(float(fan_in))
        w = jax.random.uniform(kw, (fan_in, fan_out), jnp.float32, -bound, bound)
        b = jax.random.uniform(kb, (fan_out,), jnp.float32, -bound, bound)

        k_pad = _round_up(fan_in, _LANE)
        n_pad = _round_up(fan_out, _LANE)
        w_pad = jnp.zeros((k_pad, n_pad), jnp.float32).at[:fan_in, :fan_out].set(w)
        b_pad = jnp.zeros((1, n_pad), jnp.float32).at[0, :fan_out].set(b)

        weights.append(w_pad.astype(jnp.bfloat16))   # native MXU input dtype
        biases.append(b_pad)                          # f32 bias-add on VPU
        relu_flags.append(bool(relu))

    return {
        "weights": tuple(weights),
        "biases": tuple(biases),
        "relu_flags": tuple(relu_flags),
        "input_size": int(input_size),
        "num_classes": int(num_classes),
    }


def _reference_forward(x, params):
    """Pure-JAX reference using identical (padded, bf16-weight, f32-acc) math."""
    m, k = x.shape
    k0_pad = params["weights"][0].shape[0]
    h = jnp.zeros((m, k0_pad), jnp.float32).at[:, :k].set(x.astype(jnp.float32))
    for w, b, relu in zip(params["weights"], params["biases"],
                          params["relu_flags"]):
        h = jnp.dot(h.astype(jnp.bfloat16), w,
                    preferred_element_type=jnp.float32) + b
        if relu:
            h = jnp.maximum(h, 0.0)
    return h[:, :params["num_classes"]]


if __name__ == "__main__":
    key = jax.random.PRNGKey(0)
    k_x, k_p, k_p2, k_x3 = jax.random.split(key, 4)

    batch = 8
    input_size = 32
    hidden_layers = [64, 48]
    num_classes = 10

    x = jax.random.normal(k_x, (batch, input_size), jnp.float32)

    # Case 1: hidden layers present (Linear -> ReLU -> Linear -> ReLU -> Linear),
    # gridless fused call, lane-dense padded output sliced to 10 classes.
    params = init_flexible_classifier(k_p, input_size, num_classes, hidden_layers)
    out = jax.block_until_ready(flexible_classifier_forward(x, params))
    assert out.shape == (batch, num_classes), out.shape
    ref = _reference_forward(x, params)
    assert jnp.allclose(out, ref, atol=1e-3, rtol=1e-3), float(
        jnp.max(jnp.abs(out - ref)))

    # Case 2: no hidden layers (single Linear).
    params2 = init_flexible_classifier(k_p2, input_size, num_classes, None)
    out2 = jax.block_until_ready(flexible_classifier_forward(x, params2))
    assert out2.shape == (batch, num_classes), out2.shape
    ref2 = _reference_forward(x, params2)
    assert jnp.allclose(out2, ref2, atol=1e-3, rtol=1e-3), float(
        jnp.max(jnp.abs(out2 - ref2)))

    # Case 3: larger batch exercises the parallel batch-tile grid path.
    x3 = jax.random.normal(k_x3, (300, input_size), jnp.float32)
    out3 = jax.block_until_ready(flexible_classifier_forward(x3, params))
    assert out3.shape == (300, num_classes), out3.shape
    ref3 = _reference_forward(x3, params)
    assert jnp.allclose(out3, ref3, atol=1e-3, rtol=1e-3), float(
        jnp.max(jnp.abs(out3 - ref3)))

    print("KERNEL_OK")
</pallas_src>

<mosaic_0001>
module attributes {stable_mosaic.version = 11 : i64} {
  func.func @_fused_mlp_kernel(%arg0: memref<8x128xf32, #tpu.memory_space<vmem>>, %arg1: memref<128x128xbf16, #tpu.memory_space<vmem>>, %arg2: memref<1x128xf32, #tpu.memory_space<vmem>>, %arg3: memref<128x128xbf16, #tpu.memory_space<vmem>>, %arg4: memref<1x128xf32, #tpu.memory_space<vmem>>, %arg5: memref<128x128xbf16, #tpu.memory_space<vmem>>, %arg6: memref<1x128xf32, #tpu.memory_space<vmem>>, %arg7: memref<8x128xf32, #tpu.memory_space<vmem>>) attributes {dimension_semantics = [], scalar_prefetch = 0 : i64, scratch_operands = 0 : i64, tpu.core_type = #tpu.core_type<tc>} {
    %c0 = arith.constant 0 : index
    %c0_0 = arith.constant 0 : index
    %0 = vector.load %arg0[%c0, %c0_0] : memref<8x128xf32, #tpu.memory_space<vmem>>, vector<8x128xf32>
    %c0_1 = arith.constant 0 : index
    %c0_2 = arith.constant 0 : index
    %1 = vector.load %arg1[%c0_1, %c0_2] : memref<128x128xbf16, #tpu.memory_space<vmem>>, vector<128x128xbf16>
    %c0_3 = arith.constant 0 : index
    %c0_4 = arith.constant 0 : index
    %2 = vector.load %arg2[%c0_3, %c0_4] : memref<1x128xf32, #tpu.memory_space<vmem>>, vector<1x128xf32>
    %3 = arith.truncf %0 : vector<8x128xf32> to vector<8x128xbf16>
    %cst = arith.constant dense<0.000000e+00> : vector<8x128xf32>
    %4 = tpu.matmul %3, %1, %cst {dimension_numbers = #tpu.dot_dimension_numbers<[1], [0], [0], [1], [0, 0, 1, 1], [], []>} : vector<8x128xbf16>, vector<128x128xbf16>, vector<8x128xf32> -> vector<8x128xf32>
    %5 = vector.broadcast %2 : vector<1x128xf32> to vector<8x128xf32>
    %6 = arith.addf %4, %5 : vector<8x128xf32>
    %cst_5 = arith.constant 0.000000e+00 : f32
    %7 = vector.broadcast %cst_5 : f32 to vector<8x128xf32>
    %8 = arith.maximumf %6, %7 : vector<8x128xf32>
    %c0_6 = arith.constant 0 : index
    %c0_7 = arith.constant 0 : index
    %9 = vector.load %arg3[%c0_6, %c0_7] : memref<128x128xbf16, #tpu.memory_space<vmem>>, vector<128x128xbf16>
    %c0_8 = arith.constant 0 : index
    %c0_9 = arith.constant 0 : index
    %10 = vector.load %arg4[%c0_8, %c0_9] : memref<1x128xf32, #tpu.memory_space<vmem>>, vector<1x128xf32>
    %11 = arith.truncf %8 : vector<8x128xf32> to vector<8x128xbf16>
    %cst_10 = arith.constant dense<0.000000e+00> : vector<8x128xf32>
    %12 = tpu.matmul %11, %9, %cst_10 {dimension_numbers = #tpu.dot_dimension_numbers<[1], [0], [0], [1], [0, 0, 1, 1], [], []>} : vector<8x128xbf16>, vector<128x128xbf16>, vector<8x128xf32> -> vector<8x128xf32>
    %13 = vector.broadcast %10 : vector<1x128xf32> to vector<8x128xf32>
    %14 = arith.addf %12, %13 : vector<8x128xf32>
    %cst_11 = arith.constant 0.000000e+00 : f32
    %15 = vector.broadcast %cst_11 : f32 to vector<8x128xf32>
    %16 = arith.maximumf %14, %15 : vector<8x128xf32>
    %c0_12 = arith.constant 0 : index
    %c0_13 = arith.constant 0 : index
    %17 = vector.load %arg5[%c0_12, %c0_13] : memref<128x128xbf16, #tpu.memory_space<vmem>>, vector<128x128xbf16>
    %c0_14 = arith.constant 0 : index
    %c0_15 = arith.constant 0 : index
    %18 = vector.load %arg6[%c0_14, %c0_15] : memref<1x128xf32, #tpu.memory_space<vmem>>, vector<1x128xf32>
    %19 = arith.truncf %16 : vector<8x128xf32> to vector<8x128xbf16>
    %cst_16 = arith.constant dense<0.000000e+00> : vector<8x128xf32>
    %20 = tpu.matmul %19, %17, %cst_16 {dimension_numbers = #tpu.dot_dimension_numbers<[1], [0], [0], [1], [0, 0, 1, 1], [], []>} : vector<8x128xbf16>, vector<128x128xbf16>, vector<8x128xf32> -> vector<8x128xf32>
    %21 = vector.broadcast %18 : vector<1x128xf32> to vector<8x128xf32>
    %22 = arith.addf %20, %21 : vector<8x128xf32>
    %c0_17 = arith.constant 0 : index
    %c0_18 = arith.constant 0 : index
    %23 = vector.load %arg7[%c0_17, %c0_18] : memref<8x128xf32, #tpu.memory_space<vmem>>, vector<8x128xf32>
    tpu.vector_store %arg7[%c0_17, %c0_18], %22 {strides = array<i32>} : memref<8x128xf32, #tpu.memory_space<vmem>>, vector<8x128xf32>,
    return
  }
}

</mosaic_0001>

<llo_original>
// kernel: _forward_impl.1
$region0: #{_forward_impl.1}
  #allocation0 [shape = 'u32[]', space=smem, size = 0x4, offset = 0x4, fixed_abs, tag = 'smem constant byte address 0x4 - core index']
  #allocation1 [shape = 'u32[144,128]{1,0:T(1,128)}', space=vmem, size = 0x12000, scoped, tag = 'internal scratch']
  %s0 = inlined_call_operand.vmem [shape: f32[8,128], index: 0, kind: input, shape index: {}]
  %s1 = inlined_call_operand.hbm [shape: bf16[128,128], index: 1, kind: input, shape index: {}]
  %s2 = inlined_call_operand.vmem [shape: f32[1,128], index: 2, kind: input, shape index: {}]
  %s3 = inlined_call_operand.hbm [shape: bf16[128,128], index: 3, kind: input, shape index: {}]
  %s4 = inlined_call_operand.vmem [shape: f32[1,128], index: 4, kind: input, shape index: {}]
  %s5 = inlined_call_operand.hbm [shape: bf16[128,128], index: 5, kind: input, shape index: {}]
  %s6 = inlined_call_operand.vmem [shape: f32[1,128], index: 6, kind: input, shape index: {}]
  %s7 = inlined_call_operand.hbm [shape: f32[8,128], index: 7, kind: output, shape index: {}]
  %s8 = sld [smem:[#allocation0]]
  $region50: #{_forward_impl.1} parent=0
    _
  %s10 = ssub.s32 1, %s8
  %s11 = scalar_select 0, %s10, %s8
  $region1: #{_forward_impl.1} parent=0
    #allocation2 [shape = 'u8[32768]{0}', space=vmem, size = 0x8000, scoped, tag = 'input window, operand 1, single buffered']
    #allocation3 [shape = 's32[1]{0}', space=sflag, size = 0x4, scoped, tag = 'scoped memory for _forward_impl.1']
    #allocation4 [shape = 's32[1]{0}', space=sflag, size = 0x4, scoped, tag = 'scoped memory for _forward_impl.1']
    #allocation5 [shape = 'u8[32768]{0}', space=vmem, size = 0x8000, scoped, tag = 'input window, operand 3, single buffered']
    #allocation6 [shape = 's32[1]{0}', space=sflag, size = 0x4, scoped, tag = 'scoped memory for _forward_impl.1']
    #allocation7 [shape = 'u8[32768]{0}', space=vmem, size = 0x8000, scoped, tag = 'input window, operand 5, single buffered']
    #allocation8 [shape = 'u8[4096]{0}', space=vmem, size = 0x1000, scoped, tag = 'output window, operand 0, single buffered']
    %12 = vsyncpa [#allocation3], 0
    %13 = vsyncpa [#allocation6], 0
    %14 = vsyncpa [#allocation4], 0
    // Predicated region
    $region2: #{_forward_impl.1} parent=1 // pred_check
      _
    $region3: #{_forward_impl.1} parent=1 // pred_check_branch
      %16 = sbr.rel (0) target = $region5
    $region4: #{_forward_impl.1} parent=1 // pred_region
      _
    $region5: #{_forward_impl.1} parent=1 // pred_fallthru
      _
    // Predicated region
    $region6: #{_forward_impl.1} parent=1 // pred_check
      _
    $region7: #{_forward_impl.1} parent=1 // pred_check_branch
      %18 = sbr.rel (0) target = $region9
    $region8: #{_forward_impl.1} parent=1 // pred_region
      %s20 = ssub.s32 1024, 1024
      %21 = vsyncadd [#allocation3], %s20
      %s22 = sshll.u32 [#allocation2], 4
      %s23 = int_to_ptr.vmem [resolvable:$true] %s22
      %28 = dma.hbm_to_vmem [thread:$0]  %s1, 1024, %s23, [#allocation3], 64, 64, 4
    $region9: #{_forward_impl.1} parent=1 // pred_fallthru
      _
    // Predicated region
    $region10: #{_forward_impl.1} parent=1 // pred_check
      _
    $region11: #{_forward_impl.1} parent=1 // pred_check_branch
      %30 = sbr.rel (0) target = $region13
    $region12: #{_forward_impl.1} parent=1 // pred_region
      _
    $region13: #{_forward_impl.1} parent=1 // pred_fallthru
      _
    // Predicated region
    $region14: #{_forward_impl.1} parent=1 // pred_check
      _
    $region15: #{_forward_impl.1} parent=1 // pred_check_branch
      %32 = sbr.rel (0) target = $region17
    $region16: #{_forward_impl.1} parent=1 // pred_region
      %s34 = ssub.s32 1024, 1024
      %35 = vsyncadd [#allocation6], %s34
      %s36 = sshll.u32 [#allocation5], 4
      %s37 = int_to_ptr.vmem [resolvable:$true] %s36
      %42 = dma.hbm_to_vmem [thread:$0]  %s3, 1024, %s37, [#allocation6], 64, 64, 4
    $region17: #{_forward_impl.1} parent=1 // pred_fallthru
      _
    // Predicated region
    $region18: #{_forward_impl.1} parent=1 // pred_check
      _
    $region19: #{_forward_impl.1} parent=1 // pred_check_branch
      %44 = sbr.rel (0) target = $region21
    $region20: #{_forward_impl.1} parent=1 // pred_region
      _
    $region21: #{_forward_impl.1} parent=1 // pred_fallthru
      _
    // Predicated region
    $region22: #{_forward_impl.1} parent=1 // pred_check
      _
    $region23: #{_forward_impl.1} parent=1 // pred_check_branch
      %46 = sbr.rel (0) target = $region25
    $region24: #{_forward_impl.1} parent=1 // pred_region
      %s48 = ssub.s32 1024, 1024
      %49 = vsyncadd [#allocation6], %s48
      %s50 = sshll.u32 [#allocation7], 4
      %s51 = int_to_ptr.vmem [resolvable:$true] %s50
      %56 = dma.hbm_to_vmem [thread:$0]  %s5, 1024, %s51, [#allocation6], 64, 64, 4
    $region25: #{_forward_impl.1} parent=1 // pred_fallthru
      _
    // Predicated region
    $region26: #{_forward_impl.1} parent=1 // pred_check
      _
    $region27: #{_forward_impl.1} parent=1 // pred_check_branch
      %58 = sbr.rel (0) target = $region29
    $region28: #{_forward_impl.1} parent=1 // pred_region
      _
    $region29: #{_forward_impl.1} parent=1 // pred_fallthru
      _
    // Predicated region
    $region30: #{_forward_impl.1} parent=1 // pred_check
      _
    $region31: #{_forward_impl.1} parent=1 // pred_check_branch
      %60 = sbr.rel (0) target = $region33
    $region32: #{_forward_impl.1} parent=1 // pred_region
      %61 = dma.done [#allocation3], 1024
    $region33: #{_forward_impl.1} parent=1 // pred_fallthru
      _
    // Predicated region
    $region34: #{_forward_impl.1} parent=1 // pred_check
      _
    $region35: #{_forward_impl.1} parent=1 // pred_check_branch
      %63 = sbr.rel (0) target = $region37
    $region36: #{_forward_impl.1} parent=1 // pred_region
      %64 = dma.done [#allocation6], 1024
    $region37: #{_forward_impl.1} parent=1 // pred_fallthru
      _
    // Predicated region
    $region38: #{_forward_impl.1} parent=1 // pred_check
      _
    $region39: #{_forward_impl.1} parent=1 // pred_check_branch
      %66 = sbr.rel (0) target = $region41
    $region40: #{_forward_impl.1} parent=1 // pred_region
      %67 = dma.done [#allocation6], 1024
    $region41: #{_forward_impl.1} parent=1 // pred_fallthru
      _
    %v69 = vld [vmem:[%s0] sm:$0xff]
    %v70 = vld [vmem:[#allocation2] sm:$0xf]
    %v71 = vld [vmem:[#allocation2 + $0x4] sm:$0xf]
    %v72 = vld [vmem:[#allocation2 + $0x8] sm:$0xf]
    %v73 = vld [vmem:[#allocation2 + $0xc] sm:$0xf]
    %v74 = vld [vmem:[#allocation2 + $0x10] sm:$0xf]
    %v75 = vld [vmem:[#allocation2 + $0x14] sm:$0xf]
    %v76 = vld [vmem:[#allocation2 + $0x18] sm:$0xf]
    %v77 = vld [vmem:[#allocation2 + $0x1c] sm:$0xf]
    %v78 = vld [vmem:[#allocation2 + $0x20] sm:$0xf]
    %v79 = vld [vmem:[#allocation2 + $0x24] sm:$0xf]
    %v80 = vld [vmem:[#allocation2 + $0x28] sm:$0xf]
    %v81 = vld [vmem:[#allocation2 + $0x2c] sm:$0xf]
    %v82 = vld [vmem:[#allocation2 + $0x30] sm:$0xf]
    %v83 = vld [vmem:[#allocation2 + $0x34] sm:$0xf]
    %v84 = vld [vmem:[#allocation2 + $0x38] sm:$0xf]
    %v85 = vld [vmem:[#allocation2 + $0x3c] sm:$0xf]
    %v86 = vld [vmem:[%s2] sm:$0x1]
    %v87 = vpack.c.bf16 %v69, %v69
    %v89 = vlaneseq
    %v90 = vshrl.u32 %v89, 7
    %v91 = vsub.s32 0, %v90
    %v92 = vrot.slane %v86, %v91
    %v110 = vunpack.c.l.b16 %v70
    %v111 = vunpack.c.l.b16 %v71
    %v112 = vunpack.c.l.b16 %v72
    %v113 = vunpack.c.l.b16 %v73
    %v114 = vunpack.c.l.b16 %v74
    %v115 = vunpack.c.l.b16 %v75
    %v116 = vunpack.c.l.b16 %v76
    %v117 = vunpack.c.l.b16 %v77
    %v118 = vunpack.c.l.b16 %v78
    %v119 = vunpack.c.l.b16 %v79
    %v120 = vunpack.c.l.b16 %v80
    %v121 = vunpack.c.l.b16 %v81
    %v122 = vunpack.c.l.b16 %v82
    %v123 = vunpack.c.l.b16 %v83
    %v124 = vunpack.c.l.b16 %v84
    %v125 = vunpack.c.l.b16 %v85
    %v126 = vpack.c.b16 %v111, %v110
    %v127 = vpack.c.b16 %v113, %v112
    %v128 = vpack.c.b16 %v115, %v114
    %v129 = vpack.c.b16 %v117, %v116
    %v130 = vpack.c.b16 %v119, %v118
    %v131 = vpack.c.b16 %v121, %v120
    %v132 = vpack.c.b16 %v123, %v122
    %v133 = vpack.c.b16 %v125, %v124
    %142 = vmatprep.subr.bf16.mxu0 0
    %143 = vmatpush1.bf16.msra.mxu0 %v126
    %144 = vmatprep.subr.bf16.mxu0 0
    %145 = vmatpush1.bf16.msra.mxu0 %v127
    %146 = vmatprep.subr.bf16.mxu0 0
    %147 = vmatpush1.bf16.msra.mxu0 %v128
    %148 = vmatprep.subr.bf16.mxu0 0
    %149 = vmatpush1.bf16.msra.mxu0 %v129
    %150 = vmatprep.subr.bf16.mxu0 0
    %151 = vmatpush1.bf16.msra.mxu0 %v130
    %152 = vmatprep.subr.bf16.mxu0 0
    %153 = vmatpush1.bf16.msra.mxu0 %v131
    %154 = vmatprep.subr.bf16.mxu0 0
    %155 = vmatpush1.bf16.msra.mxu0 %v132
    %156 = vmatprep.subr.bf16.mxu0 0
    %157 = vmatpush1.bf16.msra.mxu0 %v133
    %158 = vmatprep.subr.bf16.mxu0 0
    %159 = vmatpush1.bf16.msra.mxu0 0
    %160 = vmatprep.subr.bf16.mxu0 0
    %161 = vmatpush1.bf16.msra.mxu0 0
    %162 = vmatprep.subr.bf16.mxu0 0
    %163 = vmatpush1.bf16.msra.mxu0 0
    %164 = vmatprep.subr.bf16.mxu0 0
    %165 = vmatpush1.bf16.msra.mxu0 0
    %166 = vmatprep.subr.bf16.mxu0 0
    %167 = vmatpush1.bf16.msra.mxu0 0
    %168 = vmatprep.subr.bf16.mxu0 0
    %169 = vmatpush1.bf16.msra.mxu0 0
    %170 = vmatprep.subr.bf16.mxu0 0
    %171 = vmatpush1.bf16.msra.mxu0 0
    %172 = vmatprep.subr.bf16.mxu0 0
    %173 = vmatpush1.bf16.msra.mxu0 0
    %174 = vmatprep.mubr.bf16.mxu0 0
    %175 = vmatmul.mubr.bf16.gmra.mrb[0].mxu0 %v87
    %v176 = vpop.f32.mrb[0].mxu0
    %v177 = vadd.f32 %v92, %v176
    %v178 = vpop.f32.mrb[0].mxu0
    %v179 = vpop.f32.mrb[0].mxu0
    %v180 = vpop.f32.mrb[0].mxu0
    %181 = vdwg.mxu0
    %v182 = vmax.f32 %v177, 0.0
    %v183 = vld [vmem:[#allocation5] sm:$0xf]
    %v184 = vld [vmem:[#allocation5 + $0x4] sm:$0xf]
    %v185 = vld [vmem:[#allocation5 + $0x8] sm:$0xf]
    %v186 = vld [vmem:[#allocation5 + $0xc] sm:$0xf]
    %v187 = vld [vmem:[#allocation5 + $0x10] sm:$0xf]
    %v188 = vld [vmem:[#allocation5 + $0x14] sm:$0xf]
    %v189 = vld [vmem:[#allocation5 + $0x18] sm:$0xf]
    %v190 = vld [vmem:[#allocation5 + $0x1c] sm:$0xf]
    %v191 = vld [vmem:[#allocation5 + $0x20] sm:$0xf]
    %v192 = vld [vmem:[#allocation5 + $0x24] sm:$0xf]
    %v193 = vld [vmem:[#allocation5 + $0x28] sm:$0xf]
    %v194 = vld [vmem:[#allocation5 + $0x2c] sm:$0xf]
    %v195 = vld [vmem:[#allocation5 + $0x30] sm:$0xf]
    %v196 = vld [vmem:[#allocation5 + $0x34] sm:$0xf]
    %v197 = vld [vmem:[#allocation5 + $0x38] sm:$0xf]
    %v198 = vld [vmem:[#allocation5 + $0x3c] sm:$0xf]
    %v199 = vld [vmem:[%s4] sm:$0x1]
    %v200 = vpack.c.bf16 %v182, %v182
    %v202 = vlaneseq
    %v203 = vshrl.u32 %v202, 7
    %v204 = vsub.s32 0, %v203
    %v205 = vrot.slane %v199, %v204
    %v223 = vunpack.c.l.b16 %v183
    %v224 = vunpack.c.l.b16 %v184
    %v225 = vunpack.c.l.b16 %v185
    %v226 = vunpack.c.l.b16 %v186
    %v227 = vunpack.c.l.b16 %v187
    %v228 = vunpack.c.l.b16 %v188
    %v229 = vunpack.c.l.b16 %v189
    %v230 = vunpack.c.l.b16 %v190
    %v231 = vunpack.c.l.b16 %v191
    %v232 = vunpack.c.l.b16 %v192
    %v233 = vunpack.c.l.b16 %v193
    %v234 = vunpack.c.l.b16 %v194
    %v235 = vunpack.c.l.b16 %v195
    %v236 = vunpack.c.l.b16 %v196
    %v237 = vunpack.c.l.b16 %v197
    %v238 = vunpack.c.l.b16 %v198
    %v239 = vpack.c.b16 %v224, %v223
    %v240 = vpack.c.b16 %v226, %v225
    %v241 = vpack.c.b16 %v228, %v227
    %v242 = vpack.c.b16 %v230, %v229
    %v243 = vpack.c.b16 %v232, %v231
    %v244 = vpack.c.b16 %v234, %v233
    %v245 = vpack.c.b16 %v236, %v235
    %v246 = vpack.c.b16 %v238, %v237
    %255 = vmatprep.subr.bf16.mxu0 0
    %256 = vmatpush1.bf16.msra.mxu0 %v239
    %257 = vmatprep.subr.bf16.mxu0 0
    %258 = vmatpush1.bf16.msra.mxu0 %v240
    %259 = vmatprep.subr.bf16.mxu0 0
    %260 = vmatpush1.bf16.msra.mxu0 %v241
    %261 = vmatprep.subr.bf16.mxu0 0
    %262 = vmatpush1.bf16.msra.mxu0 %v242
    %263 = vmatprep.subr.bf16.mxu0 0
    %264 = vmatpush1.bf16.msra.mxu0 %v243
    %265 = vmatprep.subr.bf16.mxu0 0
    %266 = vmatpush1.bf16.msra.mxu0 %v244
    %267 = vmatprep.subr.bf16.mxu0 0
    %268 = vmatpush1.bf16.msra.mxu0 %v245
    %269 = vmatprep.subr.bf16.mxu0 0
    %270 = vmatpush1.bf16.msra.mxu0 %v246
    %271 = vmatprep.subr.bf16.mxu0 0
    %272 = vmatpush1.bf16.msra.mxu0 0
    %273 = vmatprep.subr.bf16.mxu0 0
    %274 = vmatpush1.bf16.msra.mxu0 0
    %275 = vmatprep.subr.bf16.mxu0 0
    %276 = vmatpush1.bf16.msra.mxu0 0
    %277 = vmatprep.subr.bf16.mxu0 0
    %278 = vmatpush1.bf16.msra.mxu0 0
    %279 = vmatprep.subr.bf16.mxu0 0
    %280 = vmatpush1.bf16.msra.mxu0 0
    %281 = vmatprep.subr.bf16.mxu0 0
    %282 = vmatpush1.bf16.msra.mxu0 0
    %283 = vmatprep.subr.bf16.mxu0 0
    %284 = vmatpush1.bf16.msra.mxu0 0
    %285 = vmatprep.subr.bf16.mxu0 0
    %286 = vmatpush1.bf16.msra.mxu0 0
    %287 = vmatprep.mubr.bf16.mxu0 0
    %288 = vmatmul.mubr.bf16.gmra.mrb[0].mxu0 %v200
    %v289 = vpop.f32.mrb[0].mxu0
    %v290 = vadd.f32 %v205, %v289
    %v291 = vpop.f32.mrb[0].mxu0
    %v292 = vpop.f32.mrb[0].mxu0
    %v293 = vpop.f32.mrb[0].mxu0
    %294 = vdwg.mxu0
    %v295 = vmax.f32 %v290, 0.0
    %v296 = vld [vmem:[#allocation7] sm:$0xf]
    %v297 = vld [vmem:[#allocation7 + $0x4] sm:$0xf]
    %v298 = vld [vmem:[#allocation7 + $0x8] sm:$0xf]
    %v299 = vld [vmem:[#allocation7 + $0xc] sm:$0xf]
    %v300 = vld [vmem:[#allocation7 + $0x10] sm:$0xf]
    %v301 = vld [vmem:[#allocation7 + $0x14] sm:$0xf]
    %v302 = vld [vmem:[#allocation7 + $0x18] sm:$0xf]
    %v303 = vld [vmem:[#allocation7 + $0x1c] sm:$0xf]
    %v304 = vld [vmem:[#allocation7 + $0x20] sm:$0xf]
    %v305 = vld [vmem:[#allocation7 + $0x24] sm:$0xf]
    %v306 = vld [vmem:[#allocation7 + $0x28] sm:$0xf]
    %v307 = vld [vmem:[#allocation7 + $0x2c] sm:$0xf]
    %v308 = vld [vmem:[#allocation7 + $0x30] sm:$0xf]
    %v309 = vld [vmem:[#allocation7 + $0x34] sm:$0xf]
    %v310 = vld [vmem:[#allocation7 + $0x38] sm:$0xf]
    %v311 = vld [vmem:[#allocation7 + $0x3c] sm:$0xf]
    %v312 = vld [vmem:[%s6] sm:$0x1]
    %v313 = vpack.c.bf16 %v295, %v295
    %v315 = vlaneseq
    %v316 = vshrl.u32 %v315, 7
    %v317 = vsub.s32 0, %v316
    %v318 = vrot.slane %v312, %v317
    %v336 = vunpack.c.l.b16 %v296
    %v337 = vunpack.c.l.b16 %v297
    %v338 = vunpack.c.l.b16 %v298
    %v339 = vunpack.c.l.b16 %v299
    %v340 = vunpack.c.l.b16 %v300
    %v341 = vunpack.c.l.b16 %v301
    %v342 = vunpack.c.l.b16 %v302
    %v343 = vunpack.c.l.b16 %v303
    %v344 = vunpack.c.l.b16 %v304
    %v345 = vunpack.c.l.b16 %v305
    %v346 = vunpack.c.l.b16 %v306
    %v347 = vunpack.c.l.b16 %v307
    %v348 = vunpack.c.l.b16 %v308
    %v349 = vunpack.c.l.b16 %v309
    %v350 = vunpack.c.l.b16 %v310
    %v351 = vunpack.c.l.b16 %v311
    %v352 = vpack.c.b16 %v337, %v336
    %v353 = vpack.c.b16 %v339, %v338
    %v354 = vpack.c.b16 %v341, %v340
    %v355 = vpack.c.b16 %v343, %v342
    %v356 = vpack.c.b16 %v345, %v344
    %v357 = vpack.c.b16 %v347, %v346
    %v358 = vpack.c.b16 %v349, %v348
    %v359 = vpack.c.b16 %v351, %v350
    %368 = vmatprep.subr.bf16.mxu0 0
    %369 = vmatpush1.bf16.msra.mxu0 %v352
    %370 = vmatprep.subr.bf16.mxu0 0
    %371 = vmatpush1.bf16.msra.mxu0 %v353
    %372 = vmatprep.subr.bf16.mxu0 0
    %373 = vmatpush1.bf16.msra.mxu0 %v354
    %374 = vmatprep.subr.bf16.mxu0 0
    %375 = vmatpush1.bf16.msra.mxu0 %v355
    %376 = vmatprep.subr.bf16.mxu0 0
    %377 = vmatpush1.bf16.msra.mxu0 %v356
    %378 = vmatprep.subr.bf16.mxu0 0
    %379 = vmatpush1.bf16.msra.mxu0 %v357
    %380 = vmatprep.subr.bf16.mxu0 0
    %381 = vmatpush1.bf16.msra.mxu0 %v358
    %382 = vmatprep.subr.bf16.mxu0 0
    %383 = vmatpush1.bf16.msra.mxu0 %v359
    %384 = vmatprep.subr.bf16.mxu0 0
    %385 = vmatpush1.bf16.msra.mxu0 0
    %386 = vmatprep.subr.bf16.mxu0 0
    %387 = vmatpush1.bf16.msra.mxu0 0
    %388 = vmatprep.subr.bf16.mxu0 0
    %389 = vmatpush1.bf16.msra.mxu0 0
    %390 = vmatprep.subr.bf16.mxu0 0
    %391 = vmatpush1.bf16.msra.mxu0 0
    %392 = vmatprep.subr.bf16.mxu0 0
    %393 = vmatpush1.bf16.msra.mxu0 0
    %394 = vmatprep.subr.bf16.mxu0 0
    %395 = vmatpush1.bf16.msra.mxu0 0
    %396 = vmatprep.subr.bf16.mxu0 0
    %397 = vmatpush1.bf16.msra.mxu0 0
    %398 = vmatprep.subr.bf16.mxu0 0
    %399 = vmatpush1.bf16.msra.mxu0 0
    %400 = vmatprep.mubr.bf16.mxu0 0
    %401 = vmatmul.mubr.bf16.gmra.mrb[0].mxu0 %v313
    %v402 = vpop.f32.mrb[0].mxu0
    %v403 = vadd.f32 %v318, %v402
    %v404 = vpop.f32.mrb[0].mxu0
    %v405 = vpop.f32.mrb[0].mxu0
    %v406 = vpop.f32.mrb[0].mxu0
    %407 = vdwg.mxu0
    %408 = vst [vmem:[#allocation8] sm:$0xff] %v403
    // Predicated region
    $region42: #{_forward_impl.1} parent=1 // pred_check
      _
    $region43: #{_forward_impl.1} parent=1 // pred_check_branch
      %410 = sbr.rel (0) target = $region45
    $region44: #{_forward_impl.1} parent=1 // pred_region
      %s412 = ssub.s32 128, 128
      %413 = vsyncadd [#allocation4], %s412
      %s415 = sshll.u32 [#allocation8], 4
      %s416 = int_to_ptr.vmem [resolvable:$true] %s415
      %418 = dma.vmem_to_hbm [thread:$0]  %s416, 128, %s7, [#allocation4]
    $region45: #{_forward_impl.1} parent=1 // pred_fallthru
      _
    // Predicated region
    $region46: #{_forward_impl.1} parent=1 // pred_check
      _
    $region47: #{_forward_impl.1} parent=1 // pred_check_branch
      %420 = sbr.rel (0) target = $region49
    $region48: #{_forward_impl.1} parent=1 // pred_region
      %421 = dma.done [#allocation4], 128
    $region49: #{_forward_impl.1} parent=1 // pred_fallthru
      _
    %422 = vsyncpa [#allocation3], 1
    %423 = vsyncpa [#allocation6], 1
    %424 = vsyncpa [#allocation4], 1

</llo_original>
